<compile_context>
chip_gen: v5e
topology: v5e:2x2
jax: 0.10.0
libtpu: 0.0.40
codegen_flags: <defaults>
</compile_context>

<pallas_src>
import functools

import numpy as np
import jax
import jax.numpy as jnp
from jax import lax
from jax.experimental import pallas as pl
from jax.experimental.pallas import tpu as pltpu


def _round_up(v, m):
    return ((v + m - 1) // m) * m


# ---------------------------------------------------------------------------
# Static 0/1 shift matrices: S[k] maps flat 3x3 input -> flat 3x3 output for
# kernel tap k (cross-correlation, zero padding).  M = sum_k w_flat[k] * S[k],
# with  out_flat = x_flat @ M.
# ---------------------------------------------------------------------------
def _shift_matrices():
    mats = []
    for di in (-1, 0, 1):          # tap order matches conv_w.reshape(9)
        for dj in (-1, 0, 1):
            s = np.zeros((9, 9), np.float32)
            for p in range(3):
                for q in range(3):
                    i, j = p + di, q + dj
                    if 0 <= i < 3 and 0 <= j < 3:
                        s[i * 3 + j, p * 3 + q] = 1.0
            mats.append(s)
    return np.stack(mats)          # (9, 9, 9)


_SHIFTS = _shift_matrices()


# ---------------------------------------------------------------------------
# Pallas kernel.  Arguments (scalar-prefetch first):
#   flag_ref : (1,)  int32 SMEM  — 1 iff global sum(x) > 0 (conv path)
#   mc_ref   : (9,10) f32 VMEM   — [:, :9] = (3*M)^T, [:, 9] = 3*b + 1 + d_flat
#   x_ref    : (9, TILE_N) f32   — lane-dense tile of x^T
#   o_ref    : (9, TILE_N) f32   — lane-dense tile of out^T
# ---------------------------------------------------------------------------
def _branching_kernel(flag_ref, mc_ref, x_ref, o_ref):
    @pl.when(flag_ref[0] > 0)
    def _conv_relu_path():
        x = x_ref[...]                       # (9, TILE_N)
        mc = mc_ref[...]                     # (9, 10)
        # 9 full-lane VPU MACs; x[k:k+1,:] is a cheap sublane broadcast and
        # mc[:, k:k+1] is a single-vreg constant column.
        acc = mc[:, 0:1] * x[0:1, :]
        for k in range(1, 9):
            acc = acc + mc[:, k:k + 1] * x[k:k + 1, :]
        o_ref[...] = jnp.maximum(acc + mc[:, 9:10], 0.0)

    @pl.when(flag_ref[0] <= 0)
    def _double_path():
        o_ref[...] = x_ref[...] * 2.0


# ---------------------------------------------------------------------------
# Wrapper: constant folding, global-branch scalar, lane-dense layout, tiling.
# ---------------------------------------------------------------------------
@functools.partial(jax.jit, static_argnames=("tile_n",))
def branching_with_internal_funcs(x, conv_w, conv_b, d, *, tile_n=8192):
    """x: (N,1,3,3) f32, conv_w: (1,1,3,3), conv_b: (1,), d: (1,1,3,3)."""
    n = x.shape[0]

    # Fold conv + affine chain into one (9,10) constant operand.
    w_flat = conv_w.reshape(9).astype(jnp.float32)
    m = jnp.tensordot(w_flat, jnp.asarray(_SHIFTS), axes=([0], [0]))   # (9, 9)
    m3t = (3.0 * m).T                                                  # (9, 9)
    cvec = (3.0 * conv_b.astype(jnp.float32)[0] + 1.0
            + d.reshape(9).astype(jnp.float32))                        # (9,)
    mc = jnp.concatenate([m3t, cvec[:, None]], axis=1)                 # (9, 10)

    # Global branch scalar (hoisted out of the kernel — required once tiled).
    flag = (jnp.sum(x) > 0.0).astype(jnp.int32).reshape(1)

    # Lane-dense layout: batch on the lane axis, padded to the tile size.
    x_t = x.reshape(n, 9).astype(jnp.float32).T                        # (9, N)
    n_pad = _round_up(n, 128)
    tile = _round_up(min(tile_n, n_pad), 128)
    n_pad = _round_up(n_pad, tile)
    if n_pad != n:
        x_t = jnp.pad(x_t, ((0, 0), (0, n_pad - n)))
    grid = (n_pad // tile,)

    out_t = pl.pallas_call(
        _branching_kernel,
        out_shape=jax.ShapeDtypeStruct((9, n_pad), jnp.float32),
        grid_spec=pltpu.PrefetchScalarGridSpec(
            num_scalar_prefetch=1,
            grid=grid,
            in_specs=[
                # fused constants: resident across the whole grid
                pl.BlockSpec((9, 10), lambda i, flag: (0, 0)),
                # lane-dense x tile, pipelined over N
                pl.BlockSpec((9, tile), lambda i, flag: (0, i)),
            ],
            out_specs=pl.BlockSpec((9, tile), lambda i, flag: (0, i)),
        ),
        compiler_params=pltpu.CompilerParams(
            dimension_semantics=("parallel",)),      # lets v7x split tiles across TCs
        cost_estimate=pl.CostEstimate(
            flops=190 * n_pad, bytes_accessed=72 * n_pad + 44, transcendentals=0),
    )(flag, mc, x_t)

    return out_t[:, :n].T.reshape(n, 1, 3, 3)


# ---------------------------------------------------------------------------
# Pure-JAX reference (mirrors the PyTorch forward).
# TODO(synk): PyTorch regenerates torch.rand(1,1,3,3) every forward; here the
# random tensor `d` is a fixed external argument shared with the reference.
# ---------------------------------------------------------------------------
def _reference(x, conv_w, conv_b, d):
    conv = lax.conv_general_dilated(
        x, conv_w, window_strides=(1, 1), padding=((1, 1), (1, 1)),
        dimension_numbers=("NCHW", "OIHW", "NCHW"))
    conv = conv + conv_b.reshape(1, 1, 1, 1)
    y = conv + 1.0
    z = conv * 2.0
    e = jnp.ones((1, 1, 3, 3), jnp.float32) * jnp.zeros((1, 1, 3, 3), jnp.float32) + d
    out = jnp.maximum(y + z + e, 0.0)
    return jnp.where(jnp.sum(x) > 0.0, out, x * 2.0)


if __name__ == "__main__":
    key = jax.random.PRNGKey(0)
    kx, kw, kb, kd, kx2 = jax.random.split(key, 5)

    # nn.Conv2d(1, 1, 3) init: U(-1/sqrt(fan_in), +), fan_in = 9.
    bound = 1.0 / 3.0
    conv_w = jax.random.uniform(kw, (1, 1, 3, 3), jnp.float32, minval=-bound, maxval=bound)
    conv_b = jax.random.uniform(kb, (1,), jnp.float32, minval=-bound, maxval=bound)
    d = jax.random.uniform(kd, (1, 1, 3, 3), jnp.float32)   # torch.rand equivalent

    ok = True

    # Small batch, both branches of the data-dependent conditional.
    n = 2
    x_pos = jnp.abs(jax.random.normal(kx, (n, 1, 3, 3), jnp.float32)) + 0.1  # sum > 0
    for x in (x_pos, -x_pos):
        out = jax.block_until_ready(branching_with_internal_funcs(x, conv_w, conv_b, d))
        ref = _reference(x, conv_w, conv_b, d)
        ok = ok and out.shape == (n, 1, 3, 3) and out.dtype == jnp.float32
        ok = ok and bool(jnp.allclose(out, ref, atol=1e-5, rtol=1e-5))

    # Larger batch with a small tile to exercise a multi-step pipelined grid.
    n2 = 300
    x_big = jax.random.normal(kx2, (n2, 1, 3, 3), jnp.float32) + 0.05
    out = jax.block_until_ready(
        branching_with_internal_funcs(x_big, conv_w, conv_b, d, tile_n=128))
    ref = _reference(x_big, conv_w, conv_b, d)
    ok = ok and out.shape == (n2, 1, 3, 3)
    ok = ok and bool(jnp.allclose(out, ref, atol=1e-5, rtol=1e-5))

    assert ok, "mismatch vs reference"
    print("KERNEL_OK")
</pallas_src>

<mosaic_0001>
module attributes {stable_mosaic.version = 11 : i64} {
  func.func @_branching_kernel(%arg0: i32, %arg1: memref<1xi32, #tpu.memory_space<smem>>, %arg2: memref<9x10xf32, #tpu.memory_space<vmem>>, %arg3: memref<9x128xf32, #tpu.memory_space<vmem>>, %arg4: memref<9x128xf32, #tpu.memory_space<vmem>>) attributes {dimension_semantics = [#tpu.dimension_semantics<parallel>], iteration_bounds = array<i64: 1>, scalar_prefetch = 1 : i64, scratch_operands = 0 : i64, tpu.core_type = #tpu.core_type<tc>, window_params = [{pipeline_mode = #tpu.pipeline_mode<synchronous>, transform_indices = @transform_0, window_bounds = array<i64: 9, 10>}, {transform_indices = @transform_1, window_bounds = array<i64: 9, 128>}, {transform_indices = @transform_2, window_bounds = array<i64: 9, 128>}]} {
    %c0 = arith.constant 0 : index
    %0 = memref.load %arg1[%c0] : memref<1xi32, #tpu.memory_space<smem>>
    %c0_i32 = arith.constant 0 : i32
    %1 = arith.cmpi sgt, %0, %c0_i32 : i32
    %2 = arith.extui %1 : i1 to i32
    %c0_i32_0 = arith.constant 0 : i32
    %3 = arith.cmpi ne, %2, %c0_i32_0 : i32
    scf.if %3 {
      %c0_4 = arith.constant 0 : index
      %c0_5 = arith.constant 0 : index
      %8 = vector.load %arg3[%c0_4, %c0_5] : memref<9x128xf32, #tpu.memory_space<vmem>>, vector<9x128xf32>
      %c0_6 = arith.constant 0 : index
      %c0_7 = arith.constant 0 : index
      %9 = vector.load %arg2[%c0_6, %c0_7] : memref<9x10xf32, #tpu.memory_space<vmem>>, vector<9x10xf32>
      %10 = vector.extract_strided_slice %9 {offsets = [0, 0], sizes = [9, 1], strides = [1, 1]} : vector<9x10xf32> to vector<9x1xf32>
      %11 = vector.extract_strided_slice %8 {offsets = [0, 0], sizes = [1, 128], strides = [1, 1]} : vector<9x128xf32> to vector<1x128xf32>
      %12 = vector.broadcast %10 : vector<9x1xf32> to vector<9x128xf32>
      %13 = vector.broadcast %11 : vector<1x128xf32> to vector<9x128xf32>
      %14 = arith.mulf %12, %13 : vector<9x128xf32>
      %15 = vector.extract_strided_slice %9 {offsets = [0, 1], sizes = [9, 1], strides = [1, 1]} : vector<9x10xf32> to vector<9x1xf32>
      %16 = vector.extract_strided_slice %8 {offsets = [1, 0], sizes = [1, 128], strides = [1, 1]} : vector<9x128xf32> to vector<1x128xf32>
      %17 = vector.broadcast %15 : vector<9x1xf32> to vector<9x128xf32>
      %18 = vector.broadcast %16 : vector<1x128xf32> to vector<9x128xf32>
      %19 = arith.mulf %17, %18 : vector<9x128xf32>
      %20 = arith.addf %14, %19 : vector<9x128xf32>
      %21 = vector.extract_strided_slice %9 {offsets = [0, 2], sizes = [9, 1], strides = [1, 1]} : vector<9x10xf32> to vector<9x1xf32>
      %22 = vector.extract_strided_slice %8 {offsets = [2, 0], sizes = [1, 128], strides = [1, 1]} : vector<9x128xf32> to vector<1x128xf32>
      %23 = vector.broadcast %21 : vector<9x1xf32> to vector<9x128xf32>
      %24 = vector.broadcast %22 : vector<1x128xf32> to vector<9x128xf32>
      %25 = arith.mulf %23, %24 : vector<9x128xf32>
      %26 = arith.addf %20, %25 : vector<9x128xf32>
      %27 = vector.extract_strided_slice %9 {offsets = [0, 3], sizes = [9, 1], strides = [1, 1]} : vector<9x10xf32> to vector<9x1xf32>
      %28 = vector.extract_strided_slice %8 {offsets = [3, 0], sizes = [1, 128], strides = [1, 1]} : vector<9x128xf32> to vector<1x128xf32>
      %29 = vector.broadcast %27 : vector<9x1xf32> to vector<9x128xf32>
      %30 = vector.broadcast %28 : vector<1x128xf32> to vector<9x128xf32>
      %31 = arith.mulf %29, %30 : vector<9x128xf32>
      %32 = arith.addf %26, %31 : vector<9x128xf32>
      %33 = vector.extract_strided_slice %9 {offsets = [0, 4], sizes = [9, 1], strides = [1, 1]} : vector<9x10xf32> to vector<9x1xf32>
      %34 = vector.extract_strided_slice %8 {offsets = [4, 0], sizes = [1, 128], strides = [1, 1]} : vector<9x128xf32> to vector<1x128xf32>
      %35 = vector.broadcast %33 : vector<9x1xf32> to vector<9x128xf32>
      %36 = vector.broadcast %34 : vector<1x128xf32> to vector<9x128xf32>
      %37 = arith.mulf %35, %36 : vector<9x128xf32>
      %38 = arith.addf %32, %37 : vector<9x128xf32>
      %39 = vector.extract_strided_slice %9 {offsets = [0, 5], sizes = [9, 1], strides = [1, 1]} : vector<9x10xf32> to vector<9x1xf32>
      %40 = vector.extract_strided_slice %8 {offsets = [5, 0], sizes = [1, 128], strides = [1, 1]} : vector<9x128xf32> to vector<1x128xf32>
      %41 = vector.broadcast %39 : vector<9x1xf32> to vector<9x128xf32>
      %42 = vector.broadcast %40 : vector<1x128xf32> to vector<9x128xf32>
      %43 = arith.mulf %41, %42 : vector<9x128xf32>
      %44 = arith.addf %38, %43 : vector<9x128xf32>
      %45 = vector.extract_strided_slice %9 {offsets = [0, 6], sizes = [9, 1], strides = [1, 1]} : vector<9x10xf32> to vector<9x1xf32>
      %46 = vector.extract_strided_slice %8 {offsets = [6, 0], sizes = [1, 128], strides = [1, 1]} : vector<9x128xf32> to vector<1x128xf32>
      %47 = vector.broadcast %45 : vector<9x1xf32> to vector<9x128xf32>
      %48 = vector.broadcast %46 : vector<1x128xf32> to vector<9x128xf32>
      %49 = arith.mulf %47, %48 : vector<9x128xf32>
      %50 = arith.addf %44, %49 : vector<9x128xf32>
      %51 = vector.extract_strided_slice %9 {offsets = [0, 7], sizes = [9, 1], strides = [1, 1]} : vector<9x10xf32> to vector<9x1xf32>
      %52 = vector.extract_strided_slice %8 {offsets = [7, 0], sizes = [1, 128], strides = [1, 1]} : vector<9x128xf32> to vector<1x128xf32>
      %53 = vector.broadcast %51 : vector<9x1xf32> to vector<9x128xf32>
      %54 = vector.broadcast %52 : vector<1x128xf32> to vector<9x128xf32>
      %55 = arith.mulf %53, %54 : vector<9x128xf32>
      %56 = arith.addf %50, %55 : vector<9x128xf32>
      %57 = vector.extract_strided_slice %9 {offsets = [0, 8], sizes = [9, 1], strides = [1, 1]} : vector<9x10xf32> to vector<9x1xf32>
      %58 = vector.extract_strided_slice %8 {offsets = [8, 0], sizes = [1, 128], strides = [1, 1]} : vector<9x128xf32> to vector<1x128xf32>
      %59 = vector.broadcast %57 : vector<9x1xf32> to vector<9x128xf32>
      %60 = vector.broadcast %58 : vector<1x128xf32> to vector<9x128xf32>
      %61 = arith.mulf %59, %60 : vector<9x128xf32>
      %62 = arith.addf %56, %61 : vector<9x128xf32>
      %63 = vector.extract_strided_slice %9 {offsets = [0, 9], sizes = [9, 1], strides = [1, 1]} : vector<9x10xf32> to vector<9x1xf32>
      %64 = vector.broadcast %63 : vector<9x1xf32> to vector<9x128xf32>
      %65 = arith.addf %62, %64 : vector<9x128xf32>
      %cst = arith.constant 0.000000e+00 : f32
      %66 = vector.broadcast %cst : f32 to vector<9x128xf32>
      %67 = arith.maximumf %65, %66 : vector<9x128xf32>
      %c0_8 = arith.constant 0 : index
      %c0_9 = arith.constant 0 : index
      %68 = vector.load %arg4[%c0_8, %c0_9] : memref<9x128xf32, #tpu.memory_space<vmem>>, vector<9x128xf32>
      tpu.vector_store %arg4[%c0_8, %c0_9], %67 {strides = array<i32>} : memref<9x128xf32, #tpu.memory_space<vmem>>, vector<9x128xf32>,
    } else {
    }
    %c0_1 = arith.constant 0 : index
    %4 = memref.load %arg1[%c0_1] : memref<1xi32, #tpu.memory_space<smem>>
    %c0_i32_2 = arith.constant 0 : i32
    %5 = arith.cmpi sle, %4, %c0_i32_2 : i32
    %6 = arith.extui %5 : i1 to i32
    %c0_i32_3 = arith.constant 0 : i32
    %7 = arith.cmpi ne, %6, %c0_i32_3 : i32
    scf.if %7 {
      %c0_4 = arith.constant 0 : index
      %c0_5 = arith.constant 0 : index
      %8 = vector.load %arg3[%c0_4, %c0_5] : memref<9x128xf32, #tpu.memory_space<vmem>>, vector<9x128xf32>
      %cst = arith.constant 2.000000e+00 : f32
      %9 = vector.broadcast %cst : f32 to vector<9x128xf32>
      %10 = arith.mulf %8, %9 : vector<9x128xf32>
      %c0_6 = arith.constant 0 : index
      %c0_7 = arith.constant 0 : index
      %11 = vector.load %arg4[%c0_6, %c0_7] : memref<9x128xf32, #tpu.memory_space<vmem>>, vector<9x128xf32>
      tpu.vector_store %arg4[%c0_6, %c0_7], %10 {strides = array<i32>} : memref<9x128xf32, #tpu.memory_space<vmem>>, vector<9x128xf32>,
    } else {
    }
    return
  }
  func.func @transform_0(%arg0: i32, %arg1: memref<1xi32, #tpu.memory_space<smem>>) -> (i32, i32) {
    %c0_i32 = arith.constant 0 : i32
    %c0_i32_0 = arith.constant 0 : i32
    %c0_i32_1 = arith.constant 0 : i32
    return %c0_i32, %c0_i32_0 : i32, i32
  }
  func.func @transform_1(%arg0: i32, %arg1: memref<1xi32, #tpu.memory_space<smem>>) -> (i32, i32) {
    %c0_i32 = arith.constant 0 : i32
    %c0_i32_0 = arith.constant 0 : i32
    return %c0_i32, %arg0 : i32, i32
  }
  func.func @transform_2(%arg0: i32, %arg1: memref<1xi32, #tpu.memory_space<smem>>) -> (i32, i32) {
    %c0_i32 = arith.constant 0 : i32
    %c0_i32_0 = arith.constant 0 : i32
    return %c0_i32, %arg0 : i32, i32
  }
}

</mosaic_0001>

<llo_original>
// kernel: branching_with_internal_funcs.1
$region0: #{branching_with_internal_funcs.1}
  #allocation0 [shape = 'u32[]', space=smem, size = 0x4, offset = 0x4, fixed_abs, tag = 'smem constant byte address 0x4 - core index']
  #allocation1 [shape = 'u32[72,128]{1,0:T(1,128)}', space=vmem, size = 0x9000, scoped, tag = 'internal scratch']
  #allocation2 [shape = 's32[1]{0}', space=sflag, size = 0x4, scoped, tag = 'scoped memory for branching_with_internal_funcs.1']
  #allocation3 [shape = 's32[1]{0:T(128)S(6)}', space=smem, size = 0x200, scoped, tag = 'prefetched SMEM operand 0']
  %s0 = inlined_call_operand.<no memory space> [shape: s32[1], index: 0, kind: input, shape index: {}]
  %s1 = inlined_call_operand.vmem [shape: f32[9,10], index: 1, kind: input, shape index: {}]
  %s2 = inlined_call_operand.vmem [shape: f32[9,128], index: 2, kind: input, shape index: {}]
  %s3 = inlined_call_operand.vmem [shape: f32[9,128], index: 3, kind: output, shape index: {}]
  %s4 = sld [smem:[#allocation0]]
  $region26: #{branching_with_internal_funcs.1} parent=0
    _
  %s6 = ssub.s32 1, %s4
  %s7 = scalar_select 0, %s6, %s4
  %8 = sst [smem:[#allocation3]] %s0
  // Predicated region
  $region2: #{branching_with_internal_funcs.1} parent=0 // pred_check
    _
  $region3: #{branching_with_internal_funcs.1} parent=0 // pred_check_branch
    %10 = sbr.rel (0) target = $region5
  $region4: #{branching_with_internal_funcs.1} parent=0 // pred_region
    _
  $region5: #{branching_with_internal_funcs.1} parent=0 // pred_fallthru
    _
  // Predicated region
  $region6: #{branching_with_internal_funcs.1} parent=0 // pred_check
    _
  $region7: #{branching_with_internal_funcs.1} parent=0 // pred_check_branch
    %12 = sbr.rel (0) target = $region9
  $region8: #{branching_with_internal_funcs.1} parent=0 // pred_region
    _
  $region9: #{branching_with_internal_funcs.1} parent=0 // pred_fallthru
    _
  %s13 = sld [smem:[#allocation3]]
  %p14 = scmp.gt.s32.totalorder %s13, 0
  // Predicated region
  $region10: #{branching_with_internal_funcs.1} parent=0 // pred_check
    %p15 = pneg %p14
  $region11: #{branching_with_internal_funcs.1} parent=0 // pred_check_branch
    %17 = sbr.rel (%p15) target = $region13
  $region12: #{branching_with_internal_funcs.1} parent=0 // pred_region
    %v18 = vld [vmem:[%s2] sm:$0xff]
    %v19 = vld [vmem:[%s2 + $0x8] sm:$0x1]
    %v20 = vld [vmem:[%s1] sm:$0xff]
    %v21 = vld [vmem:[%s1 + $0x8] sm:$0x1]
    %23 = vset.pattern.permute.xlu0 0
    %24 = vperm.xlu0 %23, %v20
    %v25 = vpop.permute.xlu0 %24
    %28 = vset.pattern.permute.xlu0 0
    %29 = vperm.xlu0 %28, %v21
    %v30 = vpop.permute.xlu0 %29
    %v32 = vperm.slane %v18, 0
    %v33 = vmul.f32 %v25, %v32
    %v34 = vmul.f32 %v30, %v32
    %35 = vset.pattern.permute.xlu0 1
    %36 = vperm.xlu0 %35, %v20
    %v37 = vpop.permute.xlu0 %36
    %39 = vset.pattern.permute.xlu0 1
    %40 = vperm.xlu0 %39, %v21
    %v41 = vpop.permute.xlu0 %40
    %v43 = vperm.slane %v18, 1
    %v44 = vmul.f32 %v37, %v43
    %v45 = vmul.f32 %v41, %v43
    %v46 = vadd.f32 %v33, %v44
    %v47 = vadd.f32 %v34, %v45
    %48 = vset.pattern.permute.xlu0 2
    %49 = vperm.xlu0 %48, %v20
    %v50 = vpop.permute.xlu0 %49
    %52 = vset.pattern.permute.xlu0 2
    %53 = vperm.xlu0 %52, %v21
    %v54 = vpop.permute.xlu0 %53
    %v56 = vperm.slane %v18, 2
    %v57 = vmul.f32 %v50, %v56
    %v58 = vmul.f32 %v54, %v56
    %v59 = vadd.f32 %v46, %v57
    %v60 = vadd.f32 %v47, %v58
    %61 = vset.pattern.permute.xlu0 3
    %62 = vperm.xlu0 %61, %v20
    %v63 = vpop.permute.xlu0 %62
    %65 = vset.pattern.permute.xlu0 3
    %66 = vperm.xlu0 %65, %v21
    %v67 = vpop.permute.xlu0 %66
    %v69 = vperm.slane %v18, 3
    %v70 = vmul.f32 %v63, %v69
    %v71 = vmul.f32 %v67, %v69
    %v72 = vadd.f32 %v59, %v70
    %v73 = vadd.f32 %v60, %v71
    %74 = vset.pattern.permute.xlu0 4
    %75 = vperm.xlu0 %74, %v20
    %v76 = vpop.permute.xlu0 %75
    %78 = vset.pattern.permute.xlu0 4
    %79 = vperm.xlu0 %78, %v21
    %v80 = vpop.permute.xlu0 %79
    %v82 = vperm.slane %v18, 4
    %v83 = vmul.f32 %v76, %v82
    %v84 = vmul.f32 %v80, %v82
    %v85 = vadd.f32 %v72, %v83
    %v86 = vadd.f32 %v73, %v84
    %87 = vset.pattern.permute.xlu0 5
    %88 = vperm.xlu0 %87, %v20
    %v89 = vpop.permute.xlu0 %88
    %91 = vset.pattern.permute.xlu0 5
    %92 = vperm.xlu0 %91, %v21
    %v93 = vpop.permute.xlu0 %92
    %v95 = vperm.slane %v18, 5
    %v96 = vmul.f32 %v89, %v95
    %v97 = vmul.f32 %v93, %v95
    %v98 = vadd.f32 %v85, %v96
    %v99 = vadd.f32 %v86, %v97
    %100 = vset.pattern.permute.xlu0 6
    %101 = vperm.xlu0 %100, %v20
    %v102 = vpop.permute.xlu0 %101
    %104 = vset.pattern.permute.xlu0 6
    %105 = vperm.xlu0 %104, %v21
    %v106 = vpop.permute.xlu0 %105
    %v108 = vperm.slane %v18, 6
    %v109 = vmul.f32 %v102, %v108
    %v110 = vmul.f32 %v106, %v108
    %v111 = vadd.f32 %v98, %v109
    %v112 = vadd.f32 %v99, %v110
    %113 = vset.pattern.permute.xlu0 7
    %114 = vperm.xlu0 %113, %v20
    %v115 = vpop.permute.xlu0 %114
    %117 = vset.pattern.permute.xlu0 7
    %118 = vperm.xlu0 %117, %v21
    %v119 = vpop.permute.xlu0 %118
    %v121 = vperm.slane %v18, 7
    %v122 = vmul.f32 %v115, %v121
    %v123 = vmul.f32 %v119, %v121
    %v124 = vadd.f32 %v111, %v122
    %v125 = vadd.f32 %v112, %v123
    %126 = vset.pattern.permute.xlu0 8
    %127 = vperm.xlu0 %126, %v20
    %v128 = vpop.permute.xlu0 %127
    %130 = vset.pattern.permute.xlu0 8
    %131 = vperm.xlu0 %130, %v21
    %v132 = vpop.permute.xlu0 %131
    %v134 = vperm.slane %v19, 0
    %v135 = vmul.f32 %v128, %v134
    %v136 = vmul.f32 %v132, %v134
    %v137 = vadd.f32 %v124, %v135
    %v138 = vadd.f32 %v125, %v136
    %139 = vset.pattern.permute.xlu0 9
    %140 = vperm.xlu0 %139, %v20
    %v141 = vpop.permute.xlu0 %140
    %143 = vset.pattern.permute.xlu0 9
    %144 = vperm.xlu0 %143, %v21
    %v145 = vpop.permute.xlu0 %144
    %v147 = vadd.f32 %v137, %v141
    %v148 = vadd.f32 %v138, %v145
    %v149 = vmax.f32 %v147, 0.0
    %v150 = vmax.f32 %v148, 0.0
    %151 = vst [vmem:[%s3] sm:$0xff] %v149
    %152 = vst [vmem:[%s3 + $0x8] sm:$0x1] %v150
  $region13: #{branching_with_internal_funcs.1} parent=0 // pred_fallthru
    _
  %s153 = sld [smem:[#allocation3]]
  %p154 = scmp.le.s32.totalorder %s153, 0
  // Predicated region
  $region14: #{branching_with_internal_funcs.1} parent=0 // pred_check
    %p155 = pneg %p154
  $region15: #{branching_with_internal_funcs.1} parent=0 // pred_check_branch
    %157 = sbr.rel (%p155) target = $region17
  $region16: #{branching_with_internal_funcs.1} parent=0 // pred_region
    %v158 = vld [vmem:[%s2] sm:$0xff]
    %v159 = vld [vmem:[%s2 + $0x8] sm:$0x1]
    %v160 = vmul.f32 %v158, 2.0
    %v161 = vmul.f32 %v159, 2.0
    %162 = vst [vmem:[%s3] sm:$0xff] %v160
    %163 = vst [vmem:[%s3 + $0x8] sm:$0x1] %v161
  $region17: #{branching_with_internal_funcs.1} parent=0 // pred_fallthru
    _
  // Predicated region
  $region18: #{branching_with_internal_funcs.1} parent=0 // pred_check
    _
  $region19: #{branching_with_internal_funcs.1} parent=0 // pred_check_branch
    %165 = sbr.rel (0) target = $region21
  $region20: #{branching_with_internal_funcs.1} parent=0 // pred_region
    _
  $region21: #{branching_with_internal_funcs.1} parent=0 // pred_fallthru
    _
  // Predicated region
  $region22: #{branching_with_internal_funcs.1} parent=0 // pred_check
    _
  $region23: #{branching_with_internal_funcs.1} parent=0 // pred_check_branch
    %167 = sbr.rel (0) target = $region25
  $region24: #{branching_with_internal_funcs.1} parent=0 // pred_region
    _
  $region25: #{branching_with_internal_funcs.1} parent=0 // pred_fallthru
    _

</llo_original>
